<compile_context>
chip_gen: v5e
topology: v5e:2x2
jax: 0.10.0
libtpu: 0.0.40
codegen_flags: <defaults>
</compile_context>

<pallas_src>
import jax
import jax.numpy as jnp
from jax.experimental import pallas as pl
from jax.experimental.pallas import tpu as pltpu


NUM_CAMERA_PARAMS = 9   # fx, cx, cy, rx, ry, rz, tx, ty, tz
LANES = 128             # TPU lane width; output / W2 / b2 padded to this


def _initial_guess_kernel(pts_ref, mask_ref, w1p_ref, w2_ref, b2_ref, out_ref):
    """One grid step = TB batch elements; point axis N on lanes.

    pts_ref : (2, TB, N)   plane 0 = u, plane 1 = v          (dense (8,128) tiles)
    mask_ref: (TB, N)      visibility mask (0/1)
    w1p_ref : (3, H, 1)    packed layer-1 weights: [w_u, w_v, b1 + w_mask]
    w2_ref  : (H, LANES)   layer-2 weights, zero-padded to lane width
    b2_ref  : (1, LANES)   layer-2 bias, zero-padded to lane width
    out_ref : (TB, LANES)  lane-dense output slab (first 9 cols are real)
    """
    u = pts_ref[0]                          # (TB, N)
    v = pts_ref[1]                          # (TB, N)
    m = mask_ref[...]                       # (TB, N)

    wu = w1p_ref[0]                         # (H, 1)
    wv = w1p_ref[1]                         # (H, 1)
    bb = w1p_ref[2]                         # (H, 1)  = b1 + w_mask (mask folded)

    # Layer 1: two VPU broadcast FMAs + bias + ReLU -> (TB, H, N).
    # (The mask term is folded into bb; exact because mask is {0,1} and the
    #  activation is multiplied by the mask again before pooling.)
    h = u[:, None, :] * wu[None] + v[:, None, :] * wv[None] + bb[None]
    h = jnp.maximum(h, 0.0)                 # (TB, H, N)

    # Masked mean pool over the point (lane) axis -> XLU lane reduce.
    sums = jnp.sum(h * m[:, None, :], axis=-1)                     # (TB, H)
    denom = jnp.maximum(jnp.sum(m, axis=-1, keepdims=True), 1.0)   # (TB, 1)
    pooled = sums * pl.reciprocal(denom, approx=False)             # (TB, H)

    # Layer 2 on the MXU: (TB, H) x (H, LANES) f32 matmul + bias.
    out_ref[...] = b2_ref[...] + jnp.dot(
        pooled, w2_ref[...], preferred_element_type=jnp.float32)


def prepare_params(params):
    """One-time (hoisted) weight preprocessing into kernel-friendly layouts."""
    w1 = jnp.asarray(params["w1"], jnp.float32)                # (3, H)
    b1 = jnp.asarray(params["b1"], jnp.float32).reshape(-1)    # (H,)
    w2 = jnp.asarray(params["w2"], jnp.float32)                # (H, 9)
    b2 = jnp.asarray(params["b2"], jnp.float32).reshape(1, -1) # (1, 9)
    h = w1.shape[1]
    # Fold the mask weight row into the bias (exact for {0,1} masks; see kernel).
    w1p = jnp.stack([w1[0], w1[1], w1[2] + b1]).reshape(3, h, 1)
    w2p = jnp.pad(w2, ((0, 0), (0, LANES - w2.shape[1])))       # (H, 128)
    b2p = jnp.pad(b2, ((0, 0), (0, LANES - b2.shape[1])))       # (1, 128)
    return {"w1p": w1p, "w2p": w2p, "b2p": b2p}


def _choose_tiling(batch):
    """Pick (TB, n_steps): few serial steps on v5e/v6e, >=2 parallel on v7x."""
    if batch <= 8:
        return 8, 1
    n_steps = 2
    tb = ((-(-batch // n_steps) + 7) // 8) * 8
    # Keep the per-step (TB, H, N) hidden slab modest for large batches.
    while tb > 256:
        n_steps *= 2
        tb = ((-(-batch // n_steps) + 7) // 8) * 8
    return tb, n_steps


def initial_guess_model(projected_points, visibility_mask, prepped):
    """Wrapper equivalent to InitialGuessModel.forward.

    projected_points: (B, N, 2) float32
    visibility_mask : (B, N)    float32 or bool
    prepped         : output of prepare_params (hoisted weight prep)
    returns dict representing a PinholeCameraModelL1 parameterisation.
    """
    w1p, w2p, b2p = prepped["w1p"], prepped["w2p"], prepped["b2p"]
    B, N, _ = projected_points.shape
    H = w1p.shape[1]

    tb, n_steps = _choose_tiling(B)
    Bp = tb * n_steps

    # Minimal per-call layout plumbing: points to (2, B, N), mask to f32.
    pts_t = jnp.transpose(projected_points.astype(jnp.float32), (2, 0, 1))
    mask = visibility_mask.astype(jnp.float32)
    if Bp != B:   # padded rows have mask == 0 -> discarded after the kernel
        pts_t = jnp.pad(pts_t, ((0, 0), (0, Bp - B), (0, 0)))
        mask = jnp.pad(mask, ((0, Bp - B), (0, 0)))

    out = pl.pallas_call(
        _initial_guess_kernel,
        out_shape=jax.ShapeDtypeStruct((Bp, LANES), jnp.float32),
        grid_spec=pltpu.PrefetchScalarGridSpec(
            num_scalar_prefetch=0,
            grid=(n_steps,),
            in_specs=[
                pl.BlockSpec((2, tb, N), lambda b: (0, b, 0)),
                pl.BlockSpec((tb, N), lambda b: (b, 0)),
                pl.BlockSpec((3, H, 1), lambda b: (0, 0, 0)),
                pl.BlockSpec((H, LANES), lambda b: (0, 0)),
                pl.BlockSpec((1, LANES), lambda b: (0, 0)),
            ],
            out_specs=pl.BlockSpec((tb, LANES), lambda b: (b, 0)),
        ),
        compiler_params=pltpu.CompilerParams(
            dimension_semantics=("parallel",)),
    )(pts_t, mask, w1p, w2p, b2p)

    cam = out[:B, :NUM_CAMERA_PARAMS]
    # PinholeCameraModelL1-style split of the parameter vector.
    return {
        "focal_length": cam[:, 0],
        "principal_point": cam[:, 1:3],
        "rotation": cam[:, 3:6],
        "translation": cam[:, 6:9],
        "raw_parameters": cam,
    }


def _reference(projected_points, visibility_mask, params):
    """Plain-JAX reference of the same forward pass (full f32 precision)."""
    w1, b1, w2, b2 = params["w1"], params["b1"], params["w2"], params["b2"]
    mask = visibility_mask.astype(jnp.float32)[..., None]
    feat = jnp.concatenate([projected_points.astype(jnp.float32), mask], -1)
    h = jnp.maximum(
        jnp.einsum("bnf,fh->bnh", feat, w1, precision="highest") + b1, 0.0)
    denom = jnp.maximum(jnp.sum(mask, axis=1), 1.0)
    pooled = jnp.sum(h * mask, axis=1) / denom
    return jnp.einsum("bh,ho->bo", pooled, w2, precision="highest") + b2


if __name__ == "__main__":
    B, N, H = 16, 128, 32   # B=16 -> 2 parallel grid steps (both v7x TCs busy)

    key = jax.random.PRNGKey(0)
    k_pts, k_mask, k_w1, k_b1, k_w2, k_b2 = jax.random.split(key, 6)

    projected_points = jax.random.normal(k_pts, (B, N, 2), dtype=jnp.float32)
    visibility_mask = (jax.random.uniform(k_mask, (B, N)) > 0.3).astype(
        jnp.float32)

    # Deterministic synthetic parameters (the PyTorch module wraps an arbitrary
    # learnable `initial_guess` sub-network; we initialize one in-script).
    params = {
        "w1": jax.random.normal(k_w1, (3, H), dtype=jnp.float32) * 0.5,
        "b1": jax.random.normal(k_b1, (1, H), dtype=jnp.float32) * 0.1,
        "w2": jax.random.normal(k_w2, (H, NUM_CAMERA_PARAMS),
                                dtype=jnp.float32) * 0.5,
        "b2": jax.random.normal(k_b2, (1, NUM_CAMERA_PARAMS),
                                dtype=jnp.float32) * 0.1,
    }

    prepped = prepare_params(params)           # hoisted, one-time weight prep
    fwd = jax.jit(initial_guess_model)

    result = fwd(projected_points, visibility_mask, prepped)
    jax.block_until_ready(result)

    ref = _reference(projected_points, visibility_mask, params)
    assert jnp.allclose(result["raw_parameters"], ref, atol=1e-4, rtol=1e-4), (
        "Pallas kernel output mismatch vs reference")

    print("KERNEL_OK")
</pallas_src>

<mosaic_0001>
module attributes {stable_mosaic.version = 11 : i64} {
  func.func @_initial_guess_kernel(%arg0: i32, %arg1: memref<2x8x128xf32, #tpu.memory_space<vmem>>, %arg2: memref<8x128xf32, #tpu.memory_space<vmem>>, %arg3: memref<3x32x1xf32, #tpu.memory_space<vmem>>, %arg4: memref<32x128xf32, #tpu.memory_space<vmem>>, %arg5: memref<1x128xf32, #tpu.memory_space<vmem>>, %arg6: memref<8x128xf32, #tpu.memory_space<vmem>>) attributes {dimension_semantics = [#tpu.dimension_semantics<parallel>], iteration_bounds = array<i64: 2>, scalar_prefetch = 0 : i64, scratch_operands = 0 : i64, tpu.core_type = #tpu.core_type<tc>, window_params = [{transform_indices = @transform_0, window_bounds = array<i64: 2, 8, 128>}, {transform_indices = @transform_1, window_bounds = array<i64: 8, 128>}, {pipeline_mode = #tpu.pipeline_mode<synchronous>, transform_indices = @transform_2, window_bounds = array<i64: 3, 32, 1>}, {pipeline_mode = #tpu.pipeline_mode<synchronous>, transform_indices = @transform_3, window_bounds = array<i64: 32, 128>}, {pipeline_mode = #tpu.pipeline_mode<synchronous>, transform_indices = @transform_4, window_bounds = array<i64: 1, 128>}, {transform_indices = @transform_5, window_bounds = array<i64: 8, 128>}]} {
    %c0 = arith.constant 0 : index
    %c0_0 = arith.constant 0 : index
    %c0_1 = arith.constant 0 : index
    %0 = vector.load %arg1[%c0, %c0_0, %c0_1] : memref<2x8x128xf32, #tpu.memory_space<vmem>>, vector<1x8x128xf32>
    %1 = vector.shape_cast %0 : vector<1x8x128xf32> to vector<8x128xf32>
    %c1 = arith.constant 1 : index
    %c0_2 = arith.constant 0 : index
    %c0_3 = arith.constant 0 : index
    %2 = vector.load %arg1[%c1, %c0_2, %c0_3] : memref<2x8x128xf32, #tpu.memory_space<vmem>>, vector<1x8x128xf32>
    %3 = vector.shape_cast %2 : vector<1x8x128xf32> to vector<8x128xf32>
    %c0_4 = arith.constant 0 : index
    %c0_5 = arith.constant 0 : index
    %4 = vector.load %arg2[%c0_4, %c0_5] : memref<8x128xf32, #tpu.memory_space<vmem>>, vector<8x128xf32>
    %c0_6 = arith.constant 0 : index
    %c0_7 = arith.constant 0 : index
    %c0_8 = arith.constant 0 : index
    %5 = vector.load %arg3[%c0_6, %c0_7, %c0_8] : memref<3x32x1xf32, #tpu.memory_space<vmem>>, vector<1x32x1xf32>
    %6 = vector.shape_cast %5 : vector<1x32x1xf32> to vector<32x1xf32>
    %c1_9 = arith.constant 1 : index
    %c0_10 = arith.constant 0 : index
    %c0_11 = arith.constant 0 : index
    %7 = vector.load %arg3[%c1_9, %c0_10, %c0_11] : memref<3x32x1xf32, #tpu.memory_space<vmem>>, vector<1x32x1xf32>
    %8 = vector.shape_cast %7 : vector<1x32x1xf32> to vector<32x1xf32>
    %c2 = arith.constant 2 : index
    %c0_12 = arith.constant 0 : index
    %c0_13 = arith.constant 0 : index
    %9 = vector.load %arg3[%c2, %c0_12, %c0_13] : memref<3x32x1xf32, #tpu.memory_space<vmem>>, vector<1x32x1xf32>
    %10 = vector.shape_cast %9 : vector<1x32x1xf32> to vector<32x1xf32>
    %11 = vector.shape_cast %1 : vector<8x128xf32> to vector<8x1x128xf32>
    %12 = vector.shape_cast %6 : vector<32x1xf32> to vector<1x32x1xf32>
    %13 = vector.broadcast %11 : vector<8x1x128xf32> to vector<8x32x128xf32>
    %14 = vector.broadcast %12 : vector<1x32x1xf32> to vector<8x32x128xf32>
    %15 = arith.mulf %13, %14 : vector<8x32x128xf32>
    %16 = vector.shape_cast %3 : vector<8x128xf32> to vector<8x1x128xf32>
    %17 = vector.shape_cast %8 : vector<32x1xf32> to vector<1x32x1xf32>
    %18 = vector.broadcast %16 : vector<8x1x128xf32> to vector<8x32x128xf32>
    %19 = vector.broadcast %17 : vector<1x32x1xf32> to vector<8x32x128xf32>
    %20 = arith.mulf %18, %19 : vector<8x32x128xf32>
    %21 = arith.addf %15, %20 : vector<8x32x128xf32>
    %22 = vector.shape_cast %10 : vector<32x1xf32> to vector<1x32x1xf32>
    %23 = vector.broadcast %22 : vector<1x32x1xf32> to vector<8x32x128xf32>
    %24 = arith.addf %21, %23 : vector<8x32x128xf32>
    %cst = arith.constant 0.000000e+00 : f32
    %25 = vector.broadcast %cst : f32 to vector<8x32x128xf32>
    %26 = arith.maximumf %24, %25 : vector<8x32x128xf32>
    %27 = vector.shape_cast %4 : vector<8x128xf32> to vector<8x1x128xf32>
    %28 = vector.broadcast %27 : vector<8x1x128xf32> to vector<8x32x128xf32>
    %29 = arith.mulf %26, %28 : vector<8x32x128xf32>
    %cst_14 = arith.constant dense<0.000000e+00> : vector<8x32xf32>
    %30 = vector.multi_reduction <add>, %29, %cst_14 [2] : vector<8x32x128xf32> to vector<8x32xf32>
    %cst_15 = arith.constant dense<0.000000e+00> : vector<8xf32>
    %31 = vector.multi_reduction <add>, %4, %cst_15 [1] : vector<8x128xf32> to vector<8xf32>
    %32 = vector.shape_cast %31 : vector<8xf32> to vector<8x1xf32>
    %cst_16 = arith.constant 1.000000e+00 : f32
    %33 = vector.broadcast %cst_16 : f32 to vector<8x1xf32>
    %34 = arith.maximumf %32, %33 : vector<8x1xf32>
    %35 = tpu.reciprocal %34 : vector<8x1xf32> -> vector<8x1xf32>
    %36 = vector.broadcast %35 : vector<8x1xf32> to vector<8x32xf32>
    %37 = arith.mulf %30, %36 : vector<8x32xf32>
    %c0_17 = arith.constant 0 : index
    %c0_18 = arith.constant 0 : index
    %38 = vector.load %arg5[%c0_17, %c0_18] : memref<1x128xf32, #tpu.memory_space<vmem>>, vector<1x128xf32>
    %c0_19 = arith.constant 0 : index
    %c0_20 = arith.constant 0 : index
    %39 = vector.load %arg4[%c0_19, %c0_20] : memref<32x128xf32, #tpu.memory_space<vmem>>, vector<32x128xf32>
    %cst_21 = arith.constant dense<0.000000e+00> : vector<8x128xf32>
    %40 = tpu.matmul %37, %39, %cst_21 {dimension_numbers = #tpu.dot_dimension_numbers<[1], [0], [0], [1], [0, 0, 1, 1], [], []>} : vector<8x32xf32>, vector<32x128xf32>, vector<8x128xf32> -> vector<8x128xf32>
    %41 = vector.broadcast %38 : vector<1x128xf32> to vector<8x128xf32>
    %42 = arith.addf %41, %40 : vector<8x128xf32>
    %c0_22 = arith.constant 0 : index
    %c0_23 = arith.constant 0 : index
    %43 = vector.load %arg6[%c0_22, %c0_23] : memref<8x128xf32, #tpu.memory_space<vmem>>, vector<8x128xf32>
    tpu.vector_store %arg6[%c0_22, %c0_23], %42 {strides = array<i32>} : memref<8x128xf32, #tpu.memory_space<vmem>>, vector<8x128xf32>,
    return
  }
  func.func @transform_0(%arg0: i32) -> (i32, i32, i32) {
    %c0_i32 = arith.constant 0 : i32
    %c0_i32_0 = arith.constant 0 : i32
    %c0_i32_1 = arith.constant 0 : i32
    return %c0_i32, %arg0, %c0_i32_0 : i32, i32, i32
  }
  func.func @transform_1(%arg0: i32) -> (i32, i32) {
    %c0_i32 = arith.constant 0 : i32
    %c0_i32_0 = arith.constant 0 : i32
    return %arg0, %c0_i32 : i32, i32
  }
  func.func @transform_2(%arg0: i32) -> (i32, i32, i32) {
    %c0_i32 = arith.constant 0 : i32
    %c0_i32_0 = arith.constant 0 : i32
    %c0_i32_1 = arith.constant 0 : i32
    %c0_i32_2 = arith.constant 0 : i32
    return %c0_i32, %c0_i32_0, %c0_i32_1 : i32, i32, i32
  }
  func.func @transform_3(%arg0: i32) -> (i32, i32) {
    %c0_i32 = arith.constant 0 : i32
    %c0_i32_0 = arith.constant 0 : i32
    %c0_i32_1 = arith.constant 0 : i32
    return %c0_i32, %c0_i32_0 : i32, i32
  }
  func.func @transform_4(%arg0: i32) -> (i32, i32) {
    %c0_i32 = arith.constant 0 : i32
    %c0_i32_0 = arith.constant 0 : i32
    %c0_i32_1 = arith.constant 0 : i32
    return %c0_i32, %c0_i32_0 : i32, i32
  }
  func.func @transform_5(%arg0: i32) -> (i32, i32) {
    %c0_i32 = arith.constant 0 : i32
    %c0_i32_0 = arith.constant 0 : i32
    return %arg0, %c0_i32 : i32, i32
  }
}

</mosaic_0001>

<llo_original>
// kernel: initial_guess_model.1
$region0: #{initial_guess_model.1}
  #allocation0 [shape = 'u32[]', space=smem, size = 0x4, offset = 0x4, fixed_abs, tag = 'smem constant byte address 0x4 - core index']
  #allocation1 [shape = 'u32[72,128]{1,0:T(1,128)}', space=vmem, size = 0x9000, scoped, tag = 'internal scratch']
  %s0 = inlined_call_operand.vmem [shape: f32[2,16,128], index: 0, kind: input, shape index: {}]
  %s1 = inlined_call_operand.vmem [shape: f32[16,128], index: 1, kind: input, shape index: {}]
  %s2 = inlined_call_operand.vmem [shape: f32[3,32,1], index: 2, kind: input, shape index: {}]
  %s3 = inlined_call_operand.vmem [shape: f32[32,128], index: 3, kind: input, shape index: {}]
  %s4 = inlined_call_operand.vmem [shape: f32[1,128], index: 4, kind: input, shape index: {}]
  %s5 = inlined_call_operand.vmem [shape: f32[16,128], index: 5, kind: output, shape index: {}]
  %s6 = sld [smem:[#allocation0]]
  $region91: #{initial_guess_model.1} parent=0
    _
  %s8 = ssub.s32 1, %s6
  %s9 = scalar_select 0, %s8, %s6
  $region1: #{initial_guess_model.1} parent=0
    #allocation2 [shape = 'u8[16384]{0}', space=vmem, size = 0x4000, scoped, tag = 'input window, operand 0']
    loop: start=0, step=1, limit=4
    $region2: #{initial_guess_model.1} parent=1 // loop_pre_header
      _
    $region3: #{initial_guess_model.1} parent=1 // loop_header
      %s11 = sphi 0, %s15
      %p12 = scmp.ge.s32.totalorder %s11, 4
      %s21 = sphi 0, %s23
      %s24 = sphi 0, %s21
      %s25 = sphi 0, %s24
      %s41 = sphi 0, %s25
      %s47 = sphi 0, %s49
      %s50 = sphi 0, %s47
      %s51 = sphi 0, %s50
      %s67 = sphi 0, %s51
      %s71 = sphi 0, %s71
      %s73 = sphi 0, %s71
      %s74 = sphi 0, %s73
      %s88 = sphi 0, %s74
      %s92 = sphi 0, %s92
      %s94 = sphi 0, %s92
      %s95 = sphi 0, %s94
      %s109 = sphi 0, %s95
      %s113 = sphi 0, %s113
      %s115 = sphi 0, %s113
      %s116 = sphi 0, %s115
      %s130 = sphi 0, %s116
      %s136 = sphi 0, %s138
      %s139 = sphi 0, %s136
      %s140 = sphi 0, %s139
      %s156 = sphi 0, %s140
    $region4: #{initial_guess_model.1} parent=1 // loop_header_branch
      %14 = sbr.rel (%p12) target = $region8
    $region5: #{initial_guess_model.1} parent=1 // loop_body
      %s16 = ssub.s32 %s11, 1
      %s17 = ssub.s32 %s11, 2
      %s18 = sadd.s32 %s11, 1
      %s19 = ssub.s32 %s11, %s18
      %p20 = scmp.eq.s32.totalorder %s19, 0
      %s22 = sadd.s32 %s21, 1
      %s23 = scalar_select %p20, %s21, %s22
      %p26 = pneg %p20
      %p27 = scmp.eq.s32.totalorder %s11, 1
      %p28 = por %p26, %p27
      %p29 = scmp.ne.s32.totalorder %s21, %s24
      %p30 = scmp.eq.s32.totalorder %s11, 0
      %p31 = por %p29, %p30
      %p32 = scmp.ne.s32.totalorder %s21, %s24
      %p33 = scmp.eq.s32.totalorder %s16, 1
      %p34 = por %p32, %p33
      %p35 = scmp.ne.s32.totalorder %s24, %s25
      %p36 = scmp.eq.s32.totalorder %s16, 0
      %p37 = por %p35, %p36
      %p38 = scmp.ne.s32.totalorder %s24, %s25
      %p39 = scmp.eq.s32.totalorder %s17, 1
      %p40 = por %p38, %p39
      %p42 = scmp.ne.s32.totalorder %s25, %s41
      %p43 = scmp.eq.s32.totalorder %s17, 0
      %p44 = por %p42, %p43
      %s45 = ssub.s32 %s11, %s18
      %p46 = scmp.eq.s32.totalorder %s45, 0
      %s48 = sadd.s32 %s47, 1
      %s49 = scalar_select %p46, %s47, %s48
      %p52 = pneg %p46
      %p53 = scmp.eq.s32.totalorder %s11, 1
      %p54 = por %p52, %p53
      %p55 = scmp.ne.s32.totalorder %s47, %s50
      %p56 = scmp.eq.s32.totalorder %s11, 0
      %p57 = por %p55, %p56
      %p58 = scmp.ne.s32.totalorder %s47, %s50
      %p59 = scmp.eq.s32.totalorder %s16, 1
      %p60 = por %p58, %p59
      %p61 = scmp.ne.s32.totalorder %s50, %s51
      %p62 = scmp.eq.s32.totalorder %s16, 0
      %p63 = por %p61, %p62
      %p64 = scmp.ne.s32.totalorder %s50, %s51
      %p65 = scmp.eq.s32.totalorder %s17, 1
      %p66 = por %p64, %p65
      %p68 = scmp.ne.s32.totalorder %s51, %s67
      %p69 = scmp.eq.s32.totalorder %s17, 0
      %p70 = por %p68, %p69
      %s72 = sadd.s32 %s71, 1
      %p75 = scmp.eq.s32.totalorder %s11, 1
      %p76 = scmp.ne.s32.totalorder %s71, %s73
      %p77 = scmp.eq.s32.totalorder %s11, 0
      %p78 = por %p76, %p77
      %p79 = scmp.ne.s32.totalorder %s71, %s73
      %p80 = scmp.eq.s32.totalorder %s16, 1
      %p81 = por %p79, %p80
      %p82 = scmp.ne.s32.totalorder %s73, %s74
      %p83 = scmp.eq.s32.totalorder %s16, 0
      %p84 = por %p82, %p83
      %p85 = scmp.ne.s32.totalorder %s73, %s74
      %p86 = scmp.eq.s32.totalorder %s17, 1
      %p87 = por %p85, %p86
      %p89 = scmp.ne.s32.totalorder %s74, %s88
      %p90 = scmp.eq.s32.totalorder %s17, 0
      %p91 = por %p89, %p90
      %s93 = sadd.s32 %s92, 1
      %p96 = scmp.eq.s32.totalorder %s11, 1
      %p97 = scmp.ne.s32.totalorder %s92, %s94
      %p98 = scmp.eq.s32.totalorder %s11, 0
      %p99 = por %p97, %p98
      %p100 = scmp.ne.s32.totalorder %s92, %s94
      %p101 = scmp.eq.s32.totalorder %s16, 1
      %p102 = por %p100, %p101
      %p103 = scmp.ne.s32.totalorder %s94, %s95
      %p104 = scmp.eq.s32.totalorder %s16, 0
      %p105 = por %p103, %p104
      %p106 = scmp.ne.s32.totalorder %s94, %s95
      %p107 = scmp.eq.s32.totalorder %s17, 1
      %p108 = por %p106, %p107
      %p110 = scmp.ne.s32.totalorder %s95, %s109
      %p111 = scmp.eq.s32.totalorder %s17, 0
      %p112 = por %p110, %p111
      %s114 = sadd.s32 %s113, 1
      %p117 = scmp.eq.s32.totalorder %s11, 1
      %p118 = scmp.ne.s32.totalorder %s113, %s115
      %p119 = scmp.eq.s32.totalorder %s11, 0
      %p120 = por %p118, %p119
      %p121 = scmp.ne.s32.totalorder %s113, %s115
      %p122 = scmp.eq.s32.totalorder %s16, 1
      %p123 = por %p121, %p122
      %p124 = scmp.ne.s32.totalorder %s115, %s116
      %p125 = scmp.eq.s32.totalorder %s16, 0
      %p126 = por %p124, %p125
      %p127 = scmp.ne.s32.totalorder %s115, %s116
      %p128 = scmp.eq.s32.totalorder %s17, 1
      %p129 = por %p127, %p128
      %p131 = scmp.ne.s32.totalorder %s116, %s130
      %p132 = scmp.eq.s32.totalorder %s17, 0
      %p133 = por %p131, %p132
      %s134 = ssub.s32 %s11, %s18
      %p135 = scmp.eq.s32.totalorder %s134, 0
      %s137 = sadd.s32 %s136, 1
      %s138 = scalar_select %p135, %s136, %s137
      %p141 = pneg %p135
      %p142 = scmp.eq.s32.totalorder %s11, 1
      %p143 = por %p141, %p142
      %p144 = scmp.ne.s32.totalorder %s136, %s139
      %p145 = scmp.eq.s32.totalorder %s11, 0
      %p146 = por %p144, %p145
      %p147 = scmp.ne.s32.totalorder %s136, %s139
      %p148 = scmp.eq.s32.totalorder %s16, 1
      %p149 = por %p147, %p148
      %p150 = scmp.ne.s32.totalorder %s139, %s140
      %p151 = scmp.eq.s32.totalorder %s16, 0
      %p152 = por %p150, %p151
      %p153 = scmp.ne.s32.totalorder %s139, %s140
      %p154 = scmp.eq.s32.totalorder %s17, 1
      %p155 = por %p153, %p154
      %p157 = scmp.ne.s32.totalorder %s140, %s156
      %p158 = scmp.eq.s32.totalorder %s17, 0
      %p159 = por %p157, %p158
      %p160 = scmp.le.s32.totalorder 1, %s11
      %p161 = scmp.lt.s32.totalorder %s11, 3
      %p162 = pnand %p160, %p161
      %p163 = pneg %p162
      // Predicated region
      $region9: #{initial_guess_model.1} parent=5 // pred_check
        _
      $region10: #{initial_guess_model.1} parent=5 // pred_check_branch
        %165 = sbr.rel (%p162) target = $region12
      $region11: #{initial_guess_model.1} parent=5 // pred_region
        %s166 = ssub.s32 %s11, 1
        // Predicated region
        $region13: #{initial_guess_model.1} parent=11 // pred_check
          %p167 = pneg %p84
        $region14: #{initial_guess_model.1} parent=11 // pred_check_branch
          %169 = sbr.rel (%p167) target = $region16
        $region15: #{initial_guess_model.1} parent=11 // pred_region
          _
        $region16: #{initial_guess_model.1} parent=11 // pred_fallthru
          _
        // Predicated region
        $region17: #{initial_guess_model.1} parent=11 // pred_check
          %p170 = pneg %p105
        $region18: #{initial_guess_model.1} parent=11 // pred_check_branch
          %172 = sbr.rel (%p170) target = $region20
        $region19: #{initial_guess_model.1} parent=11 // pred_region
          _
        $region20: #{initial_guess_model.1} parent=11 // pred_fallthru
          _
        // Predicated region
        $region21: #{initial_guess_model.1} parent=11 // pred_check
          %p173 = pneg %p126
        $region22: #{initial_guess_model.1} parent=11 // pred_check_branch
          %175 = sbr.rel (%p173) target = $region24
        $region23: #{initial_guess_model.1} parent=11 // pred_region
          _
        $region24: #{initial_guess_model.1} parent=11 // pred_fallthru
          _
      $region12: #{initial_guess_model.1} parent=5 // pred_fallthru
        _
      %p176 = scmp.lt.s32.totalorder %s11, 2
      // Predicated region
      $region25: #{initial_guess_model.1} parent=5 // pred_check
        %p177 = pneg %p176
      $region26: #{initial_guess_model.1} parent=5 // pred_check_branch
        %179 = sbr.rel (%p177) target = $region28
      $region27: #{initial_guess_model.1} parent=5 // pred_region
        // Predicated region
        $region29: #{initial_guess_model.1} parent=27 // pred_check
          %p180 = pneg %p31
        $region30: #{initial_guess_model.1} parent=27 // pred_check_branch
          %182 = sbr.rel (%p180) target = $region32
        $region31: #{initial_guess_model.1} parent=27 // pred_region
          %s183 = sand.u32 %s21, 1
          %s184 = sand.u32 %s21, 1
          %s185 = smul.addr %s184, 16
          %s186 = scalar_lea.vmem [#allocation2], %s185
          %s187 = smul.addr %s11, 8
          %s188 = scalar_lea.vmem %s0, %s187
          // Predicated region
          $region33: #{initial_guess_model.1} parent=31 // pred_check
            _
          $region34: #{initial_guess_model.1} parent=31 // pred_check_branch
            %190 = sbr.rel (0) target = $region36
          $region35: #{initial_guess_model.1} parent=31 // pred_region
            // Predicated region
            $region37: #{initial_guess_model.1} parent=35 // pred_check
              _
            $region38: #{initial_guess_model.1} parent=35 // pred_check_branch
              %192 = sbr.rel (0) target = $region40
            $region39: #{initial_guess_model.1} parent=35 // pred_region
              // Predicated region
              $region52: #{initial_guess_model.1} parent=39 // pred_check
                _
              $region53: #{initial_guess_model.1} parent=39 // pred_check_branch
                %210 = sbr.rel (0) target = $region55
              $region54: #{initial_guess_model.1} parent=39 // pred_region
                loop: start=0, step=1, limit=1
                $region56: #{initial_guess_model.1} parent=54 // loop_pre_header
                  _
                $region57: #{initial_guess_model.1} parent=54 // loop_header
                  %s212 = sphi 0, %s216
                  %p213 = scmp.ge.s32.totalorder %s212, 1
                  %s217 = sphi %s188, %s188
                  %s218 = sphi %s186, %s186
                $region58: #{initial_guess_model.1} parent=54 // loop_header_branch
                  %215 = sbr.rel (%p213) target = $region62
                $region59: #{initial_guess_model.1} parent=54 // loop_body
                  %v219 = vld [vmem:[%s217] sm:$0xff]
                  %220 = vst [vmem:[%s218] sm:$0xff] %v219
                  %v221 = vld [vmem:[%s217 + $0x10] sm:$0xff]
                  %222 = vst [vmem:[%s218 + $0x8] sm:$0xff] %v221
                $region60: #{initial_guess_model.1} parent=54 // loop_footer
                  %s216 = sadd.s32 1, %s212
                $region61: #{initial_guess_model.1} parent=54 // loop_footer_branch
                  %211 = sbr.rel target = $region57
                $region62: #{initial_guess_model.1} parent=54 // loop_exit
                  _
              $region55: #{initial_guess_model.1} parent=39 // pred_fallthru
                _
              // Predicated region
              $region63: #{initial_guess_model.1} parent=39 // pred_check
                _
              $region64: #{initial_guess_model.1} parent=39 // pred_check_branch
                %224 = sbr.rel target = $region66
              $region65: #{initial_guess_model.1} parent=39 // pred_region
                _
              $region66: #{initial_guess_model.1} parent=39 // pred_fallthru
                _
            $region40: #{initial_guess_model.1} parent=35 // pred_fallthru
              _
            // Predicated region
            $region41: #{initial_guess_model.1} parent=35 // pred_check
              _
            $region42: #{initial_guess_model.1} parent=35 // pred_check_branch
              %194 = sbr.rel target = $region44
            $region43: #{initial_guess_model.1} parent=35 // pred_region
              %s196 = ssub.s32 256, 1
              loop: start=0, step=1, limit=1
              $region45: #{initial_guess_model.1} parent=43 // loop_pre_header
                _
              $region46: #{initial_guess_model.1} parent=43 // loop_header
                %s198 = sphi 0, %s202
                %p199 = scmp.ge.s32.totalorder %s198, 1
                %s203 = sphi %s188, %s188
                %s204 = sphi %s186, %s186
              $region47: #{initial_guess_model.1} parent=43 // loop_header_branch
                %201 = sbr.rel (%p199) target = $region51
              $region48: #{initial_guess_model.1} parent=43 // loop_body
                %v205 = vld [vmem:[%s203] sm:%s196]
                %206 = vst [vmem:[%s204] sm:%s196] %v205
                %v207 = vld [vmem:[%s203 + $0x10] sm:%s196]
                %208 = vst [vmem:[%s204 + $0x8] sm:%s196] %v207
              $region49: #{initial_guess_model.1} parent=43 // loop_footer
                %s202 = sadd.s32 1, %s198
              $region50: #{initial_guess_model.1} parent=43 // loop_footer_branch
                %197 = sbr.rel target = $region46
              $region51: #{initial_guess_model.1} parent=43 // loop_exit
                _
            $region44: #{initial_guess_model.1} parent=35 // pred_fallthru
              _
          $region36: #{initial_guess_model.1} parent=31 // pred_fallthru
            _
          %225 = vnop
        $region32: #{initial_guess_model.1} parent=27 // pred_fallthru
          _
        // Predicated region
        $region67: #{initial_guess_model.1} parent=27 // pred_check
          %p226 = pneg %p57
        $region68: #{initial_guess_model.1} parent=27 // pred_check_branch
          %228 = sbr.rel (%p226) target = $region70
        $region69: #{initial_guess_model.1} parent=27 // pred_region
          %p229 = scmp.lt.s32.totalorder %s11, 1
          %s230 = scalar_select %p229, %s11, 1
          %s231 = smul.addr %s230, 8
          %s232 = scalar_lea.vmem %s1, %s231
        $region70: #{initial_guess_model.1} parent=27 // pred_fallthru
          _
      $region28: #{initial_guess_model.1} parent=5 // pred_fallthru
        _
      %p233 = scmp.le.s32.totalorder 1, %s11
      %p234 = scmp.lt.s32.totalorder %s11, 3
      %p235 = pnand %p233, %p234
      %p236 = pneg %p235
      // Predicated region
      $region71: #{initial_guess_model.1} parent=5 // pred_check
        _
      $region72: #{initial_guess_model.1} parent=5 // pred_check_branch
        %238 = sbr.rel (%p235) target = $region74
      $region73: #{initial_guess_model.1} parent=5 // pred_region
        %s239 = ssub.s32 %s11, 1
        %s240 = sand.u32 %s24, 1
        %s241 = sand.u32 %s24, 1
        %s242 = smul.addr %s241, 16
        %s243 = scalar_lea.vmem [#allocation2], %s242
        // Predicated region
        $region75: #{initial_guess_model.1} parent=73 // pred_check
          %p244 = pneg %p37
        $region76: #{initial_guess_model.1} parent=73 // pred_check_branch
          %246 = sbr.rel (%p244) target = $region78
        $region77: #{initial_guess_model.1} parent=73 // pred_region
          _
        $region78: #{initial_guess_model.1} parent=73 // pred_fallthru
          _
        %s247 = sand.u32 %s24, 1
        %s248 = sand.u32 %s24, 1
        %s249 = smul.addr %s248, 16
        %s250 = scalar_lea.vmem [#allocation2], %s249
        %p251 = pneg %p37
        %p252 = pneg %p34
        %p253 = scmp.lt.s32.totalorder %s16, 1
        %s254 = scalar_select %p253, %s16, 1
        %s255 = smul.addr %s254, 8
        %s256 = scalar_lea.vmem %s1, %s255
        %p257 = pneg %p63
        %p258 = pneg %p60
        %p259 = pneg %p84
        %p260 = pneg %p81
        %p261 = pneg %p105
        %p262 = pneg %p102
        %p263 = pneg %p126
        %p264 = pneg %p123
        %p265 = pneg %p152
        %p266 = pneg %p149
        %p267 = scmp.lt.s32.totalorder %s16, 1
        %s268 = scalar_select %p267, %s16, 1
        %s269 = smul.addr %s268, 8
        %s270 = scalar_lea.vmem %s5, %s269
        %p271 = scmp.lt.s32.totalorder %s16, 1
        %s272 = scalar_select %p271, %s16, 1
        %s273 = smul.addr %s272, 8
        %s274 = scalar_lea.vmem %s1, %s273
        %p275 = scmp.lt.s32.totalorder %s16, 1
        %s276 = scalar_select %p275, %s16, 1
        %s277 = smul.addr %s276, 8
        %s278 = scalar_lea.vmem %s5, %s277
        %v279 = vld [vmem:[%s243] sm:$0xff]
        %s280 = scalar_lea.vmem %s243, 8 [#allocation2]
        %v281 = vld [vmem:[%s280] sm:$0xff]
        %v282 = vld [vmem:[%s274] sm:$0xff]
        %v283 = vld [vmem:[%s2] sm:$0xff]
        %v284 = vld [vmem:[%s2 + $0x8] sm:$0xff]
        %v285 = vld [vmem:[%s2 + $0x10] sm:$0xff]
        %v286 = vld [vmem:[%s2 + $0x18] sm:$0xff]
        %s287 = scalar_lea.vmem %s2, 32
        %v288 = vld [vmem:[%s287] sm:$0xff]
        %v289 = vld [vmem:[%s287 + $0x8] sm:$0xff]
        %v290 = vld [vmem:[%s287 + $0x10] sm:$0xff]
        %v291 = vld [vmem:[%s287 + $0x18] sm:$0xff]
        %s292 = scalar_lea.vmem %s2, 64
        %v293 = vld [vmem:[%s292] sm:$0xff]
        %v294 = vld [vmem:[%s292 + $0x8] sm:$0xff]
        %v295 = vld [vmem:[%s292 + $0x10] sm:$0xff]
        %v296 = vld [vmem:[%s292 + $0x18] sm:$0xff]
        %v298 = vrot.slane %v279, 1
        %v299 = vrot.slane %v279, 2
        %v300 = vrot.slane %v279, 3
        %v301 = vrot.slane %v279, 4
        %v302 = vrot.slane %v279, 5
        %v303 = vrot.slane %v279, 6
        %v304 = vrot.slane %v279, 7
        %v305 = vperm.slane %v279, 0
        %v306 = vperm.slane %v298, 0
        %v307 = vperm.slane %v299, 0
        %v308 = vperm.slane %v300, 0
        %v309 = vperm.slane %v301, 0
        %v310 = vperm.slane %v302, 0
        %v311 = vperm.slane %v303, 0
        %v312 = vperm.slane %v304, 0
        %322 = vset.pattern.permute.xlu0 0
        %323 = vperm.xlu0 %322, %v283
        %v324 = vpop.permute.xlu0 %323
        %327 = vset.pattern.permute.xlu0 0
        %328 = vperm.xlu0 %327, %v284
        %v329 = vpop.permute.xlu0 %328
        %332 = vset.pattern.permute.xlu0 0
        %333 = vperm.xlu0 %332, %v285
        %v334 = vpop.permute.xlu0 %333
        %337 = vset.pattern.permute.xlu0 0
        %338 = vperm.xlu0 %337, %v286
        %v339 = vpop.permute.xlu0 %338
        %v341 = vmul.f32 %v305, %v324
        %v342 = vmul.f32 %v305, %v329
        %v343 = vmul.f32 %v305, %v334
        %v344 = vmul.f32 %v305, %v339
        %v345 = vmul.f32 %v306, %v324
        %v346 = vmul.f32 %v306, %v329
        %v347 = vmul.f32 %v306, %v334
        %v348 = vmul.f32 %v306, %v339
        %v349 = vmul.f32 %v307, %v324
        %v350 = vmul.f32 %v307, %v329
        %v351 = vmul.f32 %v307, %v334
        %v352 = vmul.f32 %v307, %v339
        %v353 = vmul.f32 %v308, %v324
        %v354 = vmul.f32 %v308, %v329
        %v355 = vmul.f32 %v308, %v334
        %v356 = vmul.f32 %v308, %v339
        %v357 = vmul.f32 %v309, %v324
        %v358 = vmul.f32 %v309, %v329
        %v359 = vmul.f32 %v309, %v334
        %v360 = vmul.f32 %v309, %v339
        %v361 = vmul.f32 %v310, %v324
        %v362 = vmul.f32 %v310, %v329
        %v363 = vmul.f32 %v310, %v334
        %v364 = vmul.f32 %v310, %v339
        %v365 = vmul.f32 %v311, %v324
        %v366 = vmul.f32 %v311, %v329
        %v367 = vmul.f32 %v311, %v334
        %v368 = vmul.f32 %v311, %v339
        %v369 = vmul.f32 %v312, %v324
        %v370 = vmul.f32 %v312, %v329
        %v371 = vmul.f32 %v312, %v334
        %v372 = vmul.f32 %v312, %v339
        %v374 = vrot.slane %v281, 1
        %v375 = vrot.slane %v281, 2
        %v376 = vrot.slane %v281, 3
        %v377 = vrot.slane %v281, 4
        %v378 = vrot.slane %v281, 5
        %v379 = vrot.slane %v281, 6
        %v380 = vrot.slane %v281, 7
        %v381 = vperm.slane %v281, 0
        %v382 = vperm.slane %v374, 0
        %v383 = vperm.slane %v375, 0
        %v384 = vperm.slane %v376, 0
        %v385 = vperm.slane %v377, 0
        %v386 = vperm.slane %v378, 0
        %v387 = vperm.slane %v379, 0
        %v388 = vperm.slane %v380, 0
        %398 = vset.pattern.permute.xlu0 0
        %399 = vperm.xlu0 %398, %v288
        %v400 = vpop.permute.xlu0 %399
        %403 = vset.pattern.permute.xlu0 0
        %404 = vperm.xlu0 %403, %v289
        %v405 = vpop.permute.xlu0 %404
        %408 = vset.pattern.permute.xlu0 0
        %409 = vperm.xlu0 %408, %v290
        %v410 = vpop.permute.xlu0 %409
        %413 = vset.pattern.permute.xlu0 0
        %414 = vperm.xlu0 %413, %v291
        %v415 = vpop.permute.xlu0 %414
        %v417 = vmul.f32 %v381, %v400
        %v418 = vmul.f32 %v381, %v405
        %v419 = vmul.f32 %v381, %v410
        %v420 = vmul.f32 %v381, %v415
        %v421 = vmul.f32 %v382, %v400
        %v422 = vmul.f32 %v382, %v405
        %v423 = vmul.f32 %v382, %v410
        %v424 = vmul.f32 %v382, %v415
        %v425 = vmul.f32 %v383, %v400
        %v426 = vmul.f32 %v383, %v405
        %v427 = vmul.f32 %v383, %v410
        %v428 = vmul.f32 %v383, %v415
        %v429 = vmul.f32 %v384, %v400
        %v430 = vmul.f32 %v384, %v405
        %v431 = vmul.f32 %v384, %v410
        %v432 = vmul.f32 %v384, %v415
        %v433 = vmul.f32 %v385, %v400
        %v434 = vmul.f32 %v385, %v405
        %v435 = vmul.f32 %v385, %v410
        %v436 = vmul.f32 %v385, %v415
        %v437 = vmul.f32 %v386, %v400
        %v438 = vmul.f32 %v386, %v405
        %v439 = vmul.f32 %v386, %v410
        %v440 = vmul.f32 %v386, %v415
        %v441 = vmul.f32 %v387, %v400
        %v442 = vmul.f32 %v387, %v405
        %v443 = vmul.f32 %v387, %v410
        %v444 = vmul.f32 %v387, %v415
        %v445 = vmul.f32 %v388, %v400
        %v446 = vmul.f32 %v388, %v405
        %v447 = vmul.f32 %v388, %v410
        %v448 = vmul.f32 %v388, %v415
        %v449 = vadd.f32 %v341, %v417
        %v450 = vadd.f32 %v342, %v418
        %v451 = vadd.f32 %v343, %v419
        %v452 = vadd.f32 %v344, %v420
        %v453 = vadd.f32 %v345, %v421
        %v454 = vadd.f32 %v346, %v422
        %v455 = vadd.f32 %v347, %v423
        %v456 = vadd.f32 %v348, %v424
        %v457 = vadd.f32 %v349, %v425
        %v458 = vadd.f32 %v350, %v426
        %v459 = vadd.f32 %v351, %v427
        %v460 = vadd.f32 %v352, %v428
        %v461 = vadd.f32 %v353, %v429
        %v462 = vadd.f32 %v354, %v430
        %v463 = vadd.f32 %v355, %v431
        %v464 = vadd.f32 %v356, %v432
        %v465 = vadd.f32 %v357, %v433
        %v466 = vadd.f32 %v358, %v434
        %v467 = vadd.f32 %v359, %v435
        %v468 = vadd.f32 %v360, %v436
        %v469 = vadd.f32 %v361, %v437
        %v470 = vadd.f32 %v362, %v438
        %v471 = vadd.f32 %v363, %v439
        %v472 = vadd.f32 %v364, %v440
        %v473 = vadd.f32 %v365, %v441
        %v474 = vadd.f32 %v366, %v442
        %v475 = vadd.f32 %v367, %v443
        %v476 = vadd.f32 %v368, %v444
        %v477 = vadd.f32 %v369, %v445
        %v478 = vadd.f32 %v370, %v446
        %v479 = vadd.f32 %v371, %v447
        %v480 = vadd.f32 %v372, %v448
        %482 = vset.pattern.permute.xlu0 0
        %483 = vperm.xlu0 %482, %v293
        %v484 = vpop.permute.xlu0 %483
        %487 = vset.pattern.permute.xlu0 0
        %488 = vperm.xlu0 %487, %v294
        %v489 = vpop.permute.xlu0 %488
        %492 = vset.pattern.permute.xlu0 0
        %493 = vperm.xlu0 %492, %v295
        %v494 = vpop.permute.xlu0 %493
        %497 = vset.pattern.permute.xlu0 0
        %498 = vperm.xlu0 %497, %v296
        %v499 = vpop.permute.xlu0 %498
        %v501 = vadd.f32 %v449, %v484
        %v502 = vadd.f32 %v450, %v489
        %v503 = vadd.f32 %v451, %v494
        %v504 = vadd.f32 %v452, %v499
        %v505 = vadd.f32 %v453, %v484
        %v506 = vadd.f32 %v454, %v489
        %v507 = vadd.f32 %v455, %v494
        %v508 = vadd.f32 %v456, %v499
        %v509 = vadd.f32 %v457, %v484
        %v510 = vadd.f32 %v458, %v489
        %v511 = vadd.f32 %v459, %v494
        %v512 = vadd.f32 %v460, %v499
        %v513 = vadd.f32 %v461, %v484
        %v514 = vadd.f32 %v462, %v489
        %v515 = vadd.f32 %v463, %v494
        %v516 = vadd.f32 %v464, %v499
        %v517 = vadd.f32 %v465, %v484
        %v518 = vadd.f32 %v466, %v489
        %v519 = vadd.f32 %v467, %v494
        %v520 = vadd.f32 %v468, %v499
        %v521 = vadd.f32 %v469, %v484
        %v522 = vadd.f32 %v470, %v489
        %v523 = vadd.f32 %v471, %v494
        %v524 = vadd.f32 %v472, %v499
        %v525 = vadd.f32 %v473, %v484
        %v526 = vadd.f32 %v474, %v489
        %v527 = vadd.f32 %v475, %v494
        %v528 = vadd.f32 %v476, %v499
        %v529 = vadd.f32 %v477, %v484
        %v530 = vadd.f32 %v478, %v489
        %v531 = vadd.f32 %v479, %v494
        %v532 = vadd.f32 %v480, %v499
        %v533 = vmax.f32 %v501, 0.0
        %v534 = vmax.f32 %v502, 0.0
        %v535 = vmax.f32 %v503, 0.0
        %v536 = vmax.f32 %v504, 0.0
        %v537 = vmax.f32 %v505, 0.0
        %v538 = vmax.f32 %v506, 0.0
        %v539 = vmax.f32 %v507, 0.0
        %v540 = vmax.f32 %v508, 0.0
        %v541 = vmax.f32 %v509, 0.0
        %v542 = vmax.f32 %v510, 0.0
        %v543 = vmax.f32 %v511, 0.0
        %v544 = vmax.f32 %v512, 0.0
        %v545 = vmax.f32 %v513, 0.0
        %v546 = vmax.f32 %v514, 0.0
        %v547 = vmax.f32 %v515, 0.0
        %v548 = vmax.f32 %v516, 0.0
        %v549 = vmax.f32 %v517, 0.0
        %v550 = vmax.f32 %v518, 0.0
        %v551 = vmax.f32 %v519, 0.0
        %v552 = vmax.f32 %v520, 0.0
        %v553 = vmax.f32 %v521, 0.0
        %v554 = vmax.f32 %v522, 0.0
        %v555 = vmax.f32 %v523, 0.0
        %v556 = vmax.f32 %v524, 0.0
        %v557 = vmax.f32 %v525, 0.0
        %v558 = vmax.f32 %v526, 0.0
        %v559 = vmax.f32 %v527, 0.0
        %v560 = vmax.f32 %v528, 0.0
        %v561 = vmax.f32 %v529, 0.0
        %v562 = vmax.f32 %v530, 0.0
        %v563 = vmax.f32 %v531, 0.0
        %v564 = vmax.f32 %v532, 0.0
        %v566 = vrot.slane %v282, 1
        %v567 = vrot.slane %v282, 2
        %v568 = vrot.slane %v282, 3
        %v569 = vrot.slane %v282, 4
        %v570 = vrot.slane %v282, 5
        %v571 = vrot.slane %v282, 6
        %v572 = vrot.slane %v282, 7
        %v573 = vperm.slane %v282, 0
        %v574 = vperm.slane %v566, 0
        %v575 = vperm.slane %v567, 0
        %v576 = vperm.slane %v568, 0
        %v577 = vperm.slane %v569, 0
        %v578 = vperm.slane %v570, 0
        %v579 = vperm.slane %v571, 0
        %v580 = vperm.slane %v572, 0
        %v589 = vmul.f32 %v533, %v573
        %v590 = vmul.f32 %v534, %v573
        %v591 = vmul.f32 %v535, %v573
        %v592 = vmul.f32 %v536, %v573
        %v593 = vmul.f32 %v537, %v574
        %v594 = vmul.f32 %v538, %v574
        %v595 = vmul.f32 %v539, %v574
        %v596 = vmul.f32 %v540, %v574
        %v597 = vmul.f32 %v541, %v575
        %v598 = vmul.f32 %v542, %v575
        %v599 = vmul.f32 %v543, %v575
        %v600 = vmul.f32 %v544, %v575
        %v601 = vmul.f32 %v545, %v576
        %v602 = vmul.f32 %v546, %v576
        %v603 = vmul.f32 %v547, %v576
        %v604 = vmul.f32 %v548, %v576
        %v605 = vmul.f32 %v549, %v577
        %v606 = vmul.f32 %v550, %v577
        %v607 = vmul.f32 %v551, %v577
        %v608 = vmul.f32 %v552, %v577
        %v609 = vmul.f32 %v553, %v578
        %v610 = vmul.f32 %v554, %v578
        %v611 = vmul.f32 %v555, %v578
        %v612 = vmul.f32 %v556, %v578
        %v613 = vmul.f32 %v557, %v579
        %v614 = vmul.f32 %v558, %v579
        %v615 = vmul.f32 %v559, %v579
        %v616 = vmul.f32 %v560, %v579
        %v617 = vmul.f32 %v561, %v580
        %v618 = vmul.f32 %v562, %v580
        %v619 = vmul.f32 %v563, %v580
        %v620 = vmul.f32 %v564, %v580
        %621 = vadd.xlane.f32.xlu0 %v589
        %v622 = vpop.xlane.xlu0 %621
        %623 = vadd.xlane.f32.xlu0 %v590
        %v624 = vpop.xlane.xlu0 %623
        %625 = vadd.xlane.f32.xlu0 %v591
        %v626 = vpop.xlane.xlu0 %625
        %627 = vadd.xlane.f32.xlu0 %v592
        %v628 = vpop.xlane.xlu0 %627
        %629 = vadd.xlane.f32.xlu0 %v593
        %v630 = vpop.xlane.xlu0 %629
        %631 = vadd.xlane.f32.xlu0 %v594
        %v632 = vpop.xlane.xlu0 %631
        %633 = vadd.xlane.f32.xlu0 %v595
        %v634 = vpop.xlane.xlu0 %633
        %635 = vadd.xlane.f32.xlu0 %v596
        %v636 = vpop.xlane.xlu0 %635
        %637 = vadd.xlane.f32.xlu0 %v597
        %v638 = vpop.xlane.xlu0 %637
        %639 = vadd.xlane.f32.xlu0 %v598
        %v640 = vpop.xlane.xlu0 %639
        %641 = vadd.xlane.f32.xlu0 %v599
        %v642 = vpop.xlane.xlu0 %641
        %643 = vadd.xlane.f32.xlu0 %v600
        %v644 = vpop.xlane.xlu0 %643
        %645 = vadd.xlane.f32.xlu0 %v601
        %v646 = vpop.xlane.xlu0 %645
        %647 = vadd.xlane.f32.xlu0 %v602
        %v648 = vpop.xlane.xlu0 %647
        %649 = vadd.xlane.f32.xlu0 %v603
        %v650 = vpop.xlane.xlu0 %649
        %651 = vadd.xlane.f32.xlu0 %v604
        %v652 = vpop.xlane.xlu0 %651
        %653 = vadd.xlane.f32.xlu0 %v605
        %v654 = vpop.xlane.xlu0 %653
        %655 = vadd.xlane.f32.xlu0 %v606
        %v656 = vpop.xlane.xlu0 %655
        %657 = vadd.xlane.f32.xlu0 %v607
        %v658 = vpop.xlane.xlu0 %657
        %659 = vadd.xlane.f32.xlu0 %v608
        %v660 = vpop.xlane.xlu0 %659
        %661 = vadd.xlane.f32.xlu0 %v609
        %v662 = vpop.xlane.xlu0 %661
        %663 = vadd.xlane.f32.xlu0 %v610
        %v664 = vpop.xlane.xlu0 %663
        %665 = vadd.xlane.f32.xlu0 %v611
        %v666 = vpop.xlane.xlu0 %665
        %667 = vadd.xlane.f32.xlu0 %v612
        %v668 = vpop.xlane.xlu0 %667
        %669 = vadd.xlane.f32.xlu0 %v613
        %v670 = vpop.xlane.xlu0 %669
        %671 = vadd.xlane.f32.xlu0 %v614
        %v672 = vpop.xlane.xlu0 %671
        %673 = vadd.xlane.f32.xlu0 %v615
        %v674 = vpop.xlane.xlu0 %673
        %675 = vadd.xlane.f32.xlu0 %v616
        %v676 = vpop.xlane.xlu0 %675
        %677 = vadd.xlane.f32.xlu0 %v617
        %v678 = vpop.xlane.xlu0 %677
        %679 = vadd.xlane.f32.xlu0 %v618
        %v680 = vpop.xlane.xlu0 %679
        %681 = vadd.xlane.f32.xlu0 %v619
        %v682 = vpop.xlane.xlu0 %681
        %683 = vadd.xlane.f32.xlu0 %v620
        %v684 = vpop.xlane.xlu0 %683
        %685 = vadd.xlane.f32.xlu0 %v282
        %v686 = vpop.xlane.xlu0 %685
        %v687 = vmax.f32 %v686, 1.0
        %v688 = vrcp.pop %v687
        %v689 = vmul.f32 %v687, %v688
        %v690 = vsub.f32 1.0, %v689
        %v691 = vmul.f32 %v688, %v690
        %v692 = vadd.f32 %v688, %v691
        %vm693 = vweird.f32 %v687
        %vm694 = vweird.f32 %v688
        %vm695 = vmor %vm693, %vm694
        %v696 = vsel %vm695, %v688, %v692
        %v697 = vand.u32 2147483647, %v687
        %vm698 = vcmp.eq.f32.partialorder %v697, 8.507059e+37
        %v699 = vand.u32 %v687, 2147483648
        %v700 = vor.u32 1.1754944e-38, %v699
        %v701 = vsel %vm698, %v700, %v696
        %v703 = vperm.slane %v701, 0
        %v704 = vperm.slane %v701, 1
        %v705 = vperm.slane %v701, 2
        %v706 = vperm.slane %v701, 3
        %v707 = vperm.slane %v701, 4
        %v708 = vperm.slane %v701, 5
        %v709 = vperm.slane %v701, 6
        %v710 = vperm.slane %v701, 7
        %v719 = vmul.f32 %v622, %v703
        %v720 = vmul.f32 %v624, %v703
        %v721 = vmul.f32 %v626, %v703
        %v722 = vmul.f32 %v628, %v703
        %v723 = vmul.f32 %v630, %v704
        %v724 = vmul.f32 %v632, %v704
        %v725 = vmul.f32 %v634, %v704
        %v726 = vmul.f32 %v636, %v704
        %v727 = vmul.f32 %v638, %v705
        %v728 = vmul.f32 %v640, %v705
        %v729 = vmul.f32 %v642, %v705
        %v730 = vmul.f32 %v644, %v705
        %v731 = vmul.f32 %v646, %v706
        %v732 = vmul.f32 %v648, %v706
        %v733 = vmul.f32 %v650, %v706
        %v734 = vmul.f32 %v652, %v706
        %v735 = vmul.f32 %v654, %v707
        %v736 = vmul.f32 %v656, %v707
        %v737 = vmul.f32 %v658, %v707
        %v738 = vmul.f32 %v660, %v707
        %v739 = vmul.f32 %v662, %v708
        %v740 = vmul.f32 %v664, %v708
        %v741 = vmul.f32 %v666, %v708
        %v742 = vmul.f32 %v668, %v708
        %v743 = vmul.f32 %v670, %v709
        %v744 = vmul.f32 %v672, %v709
        %v745 = vmul.f32 %v674, %v709
        %v746 = vmul.f32 %v676, %v709
        %v747 = vmul.f32 %v678, %v710
        %v748 = vmul.f32 %v680, %v710
        %v749 = vmul.f32 %v682, %v710
        %v750 = vmul.f32 %v684, %v710
        %v751 = vld [vmem:[%s4] sm:$0x1]
        %v752 = vld [vmem:[%s3] sm:$0xff]
        %v753 = vld [vmem:[%s3 + $0x8] sm:$0xff]
        %v754 = vld [vmem:[%s3 + $0x10] sm:$0xff]
        %v755 = vld [vmem:[%s3 + $0x18] sm:$0xff]
        %788 = vset.pattern.permute.xlu0 0
        %789 = vperm.xlu0 %788, %v719
        %v790 = vpop.permute.xlu0 %789
        %791 = vset.pattern.permute.xlu0 0
        %792 = vperm.xlu0 %791, %v720
        %v793 = vpop.permute.xlu0 %792
        %794 = vset.pattern.permute.xlu0 0
        %795 = vperm.xlu0 %794, %v721
        %v796 = vpop.permute.xlu0 %795
        %797 = vset.pattern.permute.xlu0 0
        %798 = vperm.xlu0 %797, %v722
        %v799 = vpop.permute.xlu0 %798
        %800 = vset.pattern.permute.xlu0 0
        %801 = vperm.xlu0 %800, %v723
        %v802 = vpop.permute.xlu0 %801
        %803 = vset.pattern.permute.xlu0 0
        %804 = vperm.xlu0 %803, %v724
        %v805 = vpop.permute.xlu0 %804
        %806 = vset.pattern.permute.xlu0 0
        %807 = vperm.xlu0 %806, %v725
        %v808 = vpop.permute.xlu0 %807
        %809 = vset.pattern.permute.xlu0 0
        %810 = vperm.xlu0 %809, %v726
        %v811 = vpop.permute.xlu0 %810
        %812 = vset.pattern.permute.xlu0 0
        %813 = vperm.xlu0 %812, %v727
        %v814 = vpop.permute.xlu0 %813
        %815 = vset.pattern.permute.xlu0 0
        %816 = vperm.xlu0 %815, %v728
        %v817 = vpop.permute.xlu0 %816
        %818 = vset.pattern.permute.xlu0 0
        %819 = vperm.xlu0 %818, %v729
        %v820 = vpop.permute.xlu0 %819
        %821 = vset.pattern.permute.xlu0 0
        %822 = vperm.xlu0 %821, %v730
        %v823 = vpop.permute.xlu0 %822
        %824 = vset.pattern.permute.xlu0 0
        %825 = vperm.xlu0 %824, %v731
        %v826 = vpop.permute.xlu0 %825
        %827 = vset.pattern.permute.xlu0 0
        %828 = vperm.xlu0 %827, %v732
        %v829 = vpop.permute.xlu0 %828
        %830 = vset.pattern.permute.xlu0 0
        %831 = vperm.xlu0 %830, %v733
        %v832 = vpop.permute.xlu0 %831
        %833 = vset.pattern.permute.xlu0 0
        %834 = vperm.xlu0 %833, %v734
        %v835 = vpop.permute.xlu0 %834
        %836 = vset.pattern.permute.xlu0 0
        %837 = vperm.xlu0 %836, %v735
        %v838 = vpop.permute.xlu0 %837
        %839 = vset.pattern.permute.xlu0 0
        %840 = vperm.xlu0 %839, %v736
        %v841 = vpop.permute.xlu0 %840
        %842 = vset.pattern.permute.xlu0 0
        %843 = vperm.xlu0 %842, %v737
        %v844 = vpop.permute.xlu0 %843
        %845 = vset.pattern.permute.xlu0 0
        %846 = vperm.xlu0 %845, %v738
        %v847 = vpop.permute.xlu0 %846
        %848 = vset.pattern.permute.xlu0 0
        %849 = vperm.xlu0 %848, %v739
        %v850 = vpop.permute.xlu0 %849
        %851 = vset.pattern.permute.xlu0 0
        %852 = vperm.xlu0 %851, %v740
        %v853 = vpop.permute.xlu0 %852
        %854 = vset.pattern.permute.xlu0 0
        %855 = vperm.xlu0 %854, %v741
        %v856 = vpop.permute.xlu0 %855
        %857 = vset.pattern.permute.xlu0 0
        %858 = vperm.xlu0 %857, %v742
        %v859 = vpop.permute.xlu0 %858
        %860 = vset.pattern.permute.xlu0 0
        %861 = vperm.xlu0 %860, %v743
        %v862 = vpop.permute.xlu0 %861
        %863 = vset.pattern.permute.xlu0 0
        %864 = vperm.xlu0 %863, %v744
        %v865 = vpop.permute.xlu0 %864
        %866 = vset.pattern.permute.xlu0 0
        %867 = vperm.xlu0 %866, %v745
        %v868 = vpop.permute.xlu0 %867
        %869 = vset.pattern.permute.xlu0 0
        %870 = vperm.xlu0 %869, %v746
        %v871 = vpop.permute.xlu0 %870
        %872 = vset.pattern.permute.xlu0 0
        %873 = vperm.xlu0 %872, %v747
        %v874 = vpop.permute.xlu0 %873
        %875 = vset.pattern.permute.xlu0 0
        %876 = vperm.xlu0 %875, %v748
        %v877 = vpop.permute.xlu0 %876
        %878 = vset.pattern.permute.xlu0 0
        %879 = vperm.xlu0 %878, %v749
        %v880 = vpop.permute.xlu0 %879
        %881 = vset.pattern.permute.xlu0 0
        %882 = vperm.xlu0 %881, %v750
        %v883 = vpop.permute.xlu0 %882
        %v884 = vlaneseq
        %v885 = vand.u32 %v884, 127
        %v886 = vperm.slane %v790, %v885
        %v887 = vadd.s32 %v885, 4294967288
        %v888 = vperm.slane %v793, %v887
        %vm889 = vcmask 130112
        %v890 = vsel %vm889, %v888, %v886
        %v891 = vadd.s32 %v885, 4294967280
        %v892 = vperm.slane %v796, %v891
        %vm893 = vcmask 195712
        %v894 = vsel %vm893, %v892, %v890
        %v895 = vadd.s32 %v885, 4294967272
        %v896 = vperm.slane %v799, %v895
        %vm897 = vcmask 261312
        %v898 = vsel %vm897, %v896, %v894
        %v899 = vperm.slane %v802, %v885
        %v900 = vperm.slane %v805, %v887
        %v901 = vsel %vm889, %v900, %v899
        %v902 = vperm.slane %v808, %v891
        %v903 = vsel %vm893, %v902, %v901
        %v904 = vperm.slane %v811, %v895
        %v905 = vsel %vm897, %v904, %v903
        %v906 = vperm.slane %v814, %v885
        %v907 = vperm.slane %v817, %v887
        %v908 = vsel %vm889, %v907, %v906
        %v909 = vperm.slane %v820, %v891
        %v910 = vsel %vm893, %v909, %v908
        %v911 = vperm.slane %v823, %v895
        %v912 = vsel %vm897, %v911, %v910
        %v913 = vperm.slane %v826, %v885
        %v914 = vperm.slane %v829, %v887
        %v915 = vsel %vm889, %v914, %v913
        %v916 = vperm.slane %v832, %v891
        %v917 = vsel %vm893, %v916, %v915
        %v918 = vperm.slane %v835, %v895
        %v919 = vsel %vm897, %v918, %v917
        %v920 = vperm.slane %v838, %v885
        %v921 = vperm.slane %v841, %v887
        %v922 = vsel %vm889, %v921, %v920
        %v923 = vperm.slane %v844, %v891
        %v924 = vsel %vm893, %v923, %v922
        %v925 = vperm.slane %v847, %v895
        %v926 = vsel %vm897, %v925, %v924
        %v927 = vperm.slane %v850, %v885
        %v928 = vperm.slane %v853, %v887
        %v929 = vsel %vm889, %v928, %v927
        %v930 = vperm.slane %v856, %v891
        %v931 = vsel %vm893, %v930, %v929
        %v932 = vperm.slane %v859, %v895
        %v933 = vsel %vm897, %v932, %v931
        %v934 = vperm.slane %v862, %v885
        %v935 = vperm.slane %v865, %v887
        %v936 = vsel %vm889, %v935, %v934
        %v937 = vperm.slane %v868, %v891
        %v938 = vsel %vm893, %v937, %v936
        %v939 = vperm.slane %v871, %v895
        %v940 = vsel %vm897, %v939, %v938
        %v941 = vperm.slane %v874, %v885
        %v942 = vperm.slane %v877, %v887
        %v943 = vsel %vm889, %v942, %v941
        %v944 = vperm.slane %v880, %v891
        %v945 = vsel %vm893, %v944, %v943
        %v946 = vperm.slane %v883, %v895
        %v947 = vsel %vm897, %v946, %v945
        %vm948 = vcmask 1041409
        %v949 = vsel %vm948, %v905, %v898
        %vm950 = vcmask 1042434
        %v951 = vsel %vm950, %v912, %v949
        %vm952 = vcmask 1043459
        %v953 = vsel %vm952, %v919, %v951
        %vm954 = vcmask 1044484
        %v955 = vsel %vm954, %v926, %v953
        %vm956 = vcmask 1045509
        %v957 = vsel %vm956, %v933, %v955
        %vm958 = vcmask 1046534
        %v959 = vsel %vm958, %v940, %v957
        %vm960 = vcmask 1047559
        %v961 = vsel %vm960, %v947, %v959
        %vm962 = vcmask 261120
        %v963 = vsel %vm962, %v961, 0
        %965 = vmatpush.msra.mxu0 0.0
        %966 = vmatpush.msra.mxu0 0.0
        %967 = vmatpush.msra.mxu0 0.0
        %968 = vmatpush.msra.mxu0 0.0
        %969 = vmatpush.msra.mxu0 0.0
        %970 = vmatpush.msra.mxu0 0.0
        %971 = vmatpush.msra.mxu0 0.0
        %972 = vmatpush.msra.mxu0 0.0
        %973 = vmatpush.msra.mxu0 0.0
        %974 = vmatpush.msra.mxu0 0.0
        %975 = vmatpush.msra.mxu0 0.0
        %976 = vmatpush.msra.mxu0 0.0
        %977 = vmatpush.msra.mxu0 %v755
        %978 = vmatpush.msra.mxu0 %v754
        %979 = vmatpush.msra.mxu0 %v753
        %980 = vmatpush.msra.mxu0 %v752
        %981 = vmatmul.f32.gmra.mxu0 %v963
        %v982 = vpop.f32.mrf.mxu0
        %v983 = vadd.f32 0.0, %v982
        %984 = vdwg.mxu0
        %v986 = vperm.slane %v751, 0
        %v988 = vadd.f32 %v986, %v983
        %989 = vst [vmem:[%s278] sm:$0xff] %v988
        %p990 = scmp.lt.s32.totalorder %s16, 1
        %s991 = scalar_select %p990, %s16, 1
        %s992 = smul.addr %s991, 8
        %s993 = scalar_lea.vmem %s5, %s992
        // Predicated region
        $region79: #{initial_guess_model.1} parent=73 // pred_check
          %p994 = pneg %p149
        $region80: #{initial_guess_model.1} parent=73 // pred_check_branch
          %996 = sbr.rel (%p994) target = $region82
        $region81: #{initial_guess_model.1} parent=73 // pred_region
          _
        $region82: #{initial_guess_model.1} parent=73 // pred_fallthru
          _
      $region74: #{initial_guess_model.1} parent=5 // pred_fallthru
        _
      %p997 = scmp.le.s32.totalorder 2, %s11
      // Predicated region
      $region83: #{initial_guess_model.1} parent=5 // pred_check
        %p998 = pneg %p997
      $region84: #{initial_guess_model.1} parent=5 // pred_check_branch
        %1000 = sbr.rel (%p998) target = $region86
      $region85: #{initial_guess_model.1} parent=5 // pred_region
        %s1001 = ssub.s32 %s11, 2
        // Predicated region
        $region87: #{initial_guess_model.1} parent=85 // pred_check
          %p1002 = pneg %p155
        $region88: #{initial_guess_model.1} parent=85 // pred_check_branch
          %1004 = sbr.rel (%p1002) target = $region90
        $region89: #{initial_guess_model.1} parent=85 // pred_region
          %p1005 = scmp.lt.s32.totalorder %s17, 1
          %s1006 = scalar_select %p1005, %s17, 1
          %s1007 = smul.addr %s1006, 8
          %s1008 = scalar_lea.vmem %s5, %s1007
        $region90: #{initial_guess_model.1} parent=85 // pred_fallthru
          _
      $region86: #{initial_guess_model.1} parent=5 // pred_fallthru
        _
    $region6: #{initial_guess_model.1} parent=1 // loop_footer
      %s15 = sadd.s32 1, %s11
    $region7: #{initial_guess_model.1} parent=1 // loop_footer_branch
      %10 = sbr.rel target = $region3
    $region8: #{initial_guess_model.1} parent=1 // loop_exit
      _

</llo_original>
